<compile_context>
chip_gen: v5e
topology: v5e:2x2
jax: 0.10.0
libtpu: 0.0.40
codegen_flags: <defaults>
</compile_context>

<pallas_src>
import functools

import jax
import jax.numpy as jnp
from jax.experimental import pallas as pl
from jax.experimental.pallas import tpu as pltpu


def _round_up(x, m):
    return ((x + m - 1) // m) * m


def _tpu_arch():
    """Best-effort TPU generation detection with a conservative fallback."""
    kind = ""
    try:
        kind = jax.devices()[0].device_kind.lower()
    except Exception:
        pass
    is_v7 = ("v7" in kind) or ("tpu7" in kind)
    is_v6 = ("v6" in kind) or ("tpu6" in kind) or ("trillium" in kind)
    return is_v6, is_v7


def head_kernel(x_ref, w1_ref, b1_ref, w2_ref, b2_ref, o_ref, *, tanh_dtype):
    # dense: x @ W1 (bf16 operands on the MXU, f32 accumulate). x may arrive
    # as f32 (cast here) or already bf16 (astype is then a no-op).
    h = jnp.dot(x_ref[...].astype(jnp.bfloat16), w1_ref[...],
                preferred_element_type=jnp.float32)
    h = h + b1_ref[...]                       # (1, Hp) f32 bias, broadcast over rows
    # tanh on the EUP. bf16 on v6e/v7x (bf16-capable EUP, and the value feeds a
    # bf16 matmul anyway); f32 on v5e.
    h = jnp.tanh(h.astype(tanh_dtype))
    # dropout: identity at inference.
    # out_proj: h @ W2 (+ b2), f32 accumulate.
    out = jnp.dot(h.astype(jnp.bfloat16), w2_ref[...],
                  preferred_element_type=jnp.float32)
    o_ref[...] = (out + b2_ref[...]).astype(o_ref.dtype)


def prepare_head_params(w1, b1, w2, b2):
    """One-time (model-load) weight preparation.

    Weights are stored pre-transposed as [in_features, out_features], so the
    kernel computes x @ W + b (== PyTorch x @ W.T + b). Pads every lane axis
    to a multiple of 128 and casts matmul operands to bf16. Zero padding is
    mathematically inert: padded W1 cols + zero b1 give tanh(0)=0, which meets
    zero-padded W2 rows.
    """
    H = w1.shape[0]
    C = w2.shape[1]
    Hp = _round_up(H, 128)
    Cp = _round_up(C, 128)
    w1p = jnp.pad(w1.astype(jnp.bfloat16), ((0, Hp - H), (0, Hp - H)))
    b1p = jnp.pad(jnp.reshape(b1, (1, -1)).astype(jnp.float32), ((0, 0), (0, Hp - H)))
    w2p = jnp.pad(w2.astype(jnp.bfloat16), ((0, Hp - H), (0, Cp - C)))
    b2p = jnp.pad(jnp.reshape(b2, (1, -1)).astype(jnp.float32), ((0, 0), (0, Cp - C)))
    return (w1p, b1p, w2p, b2p)


def hubert_classification_head(x, params, num_class):
    """x: [B, H] f32; params: output of prepare_head_params; num_class: int."""
    w1p, b1p, w2p, b2p = params
    B, H = x.shape
    Hp = w1p.shape[0]
    Cp = w2p.shape[1]
    C = num_class

    is_v6, is_v7 = _tpu_arch()
    tanh_dtype = jnp.bfloat16 if (is_v6 or is_v7) else jnp.float32
    n_tc = 2 if is_v7 else 1
    phys_vmem = (64 << 20) if is_v7 else (128 << 20)
    # Leave headroom for compiler-internal scratch (esp. v7x's 64 MiB VMEM).
    vmem_limit = min(64 << 20, int(phys_vmem * 0.8))

    # If hidden is already lane-dense, keep x in f32 HBM and cast in-kernel;
    # otherwise we must produce a padded copy anyway, so make it bf16.
    x_needs_hpad = (H != Hp)
    x_elem_bytes = 2 if x_needs_hpad else 4

    # Divisor-aware batch tiling: bounds pad waste to <8 rows per tile.
    cap = 1024 if is_v7 else 2048
    n_tiles = max(1, pl.cdiv(B, cap))
    if n_tc >= 2 and B >= 16:
        n_tiles = max(n_tiles, n_tc)   # guarantee >=2 steps so megacore splits

    def _vmem_est(tb):
        return (2 * tb * Hp * x_elem_bytes      # x tile (double-buffered)
                + 2 * tb * Cp * 4               # out tile (double-buffered)
                + Hp * Hp * 2 + Hp * Cp * 2     # resident weights (single-buffered)
                + (Hp + Cp) * 4                 # biases
                + 2 * tb * Hp * 4)              # f32 intermediates headroom

    while True:
        tb = max(8, _round_up(pl.cdiv(B, n_tiles), 8))
        if tb == 8 or _vmem_est(tb) <= int(vmem_limit * 0.75):
            break
        n_tiles += 1
    Bp = n_tiles * tb

    if x_needs_hpad:
        xp = jnp.pad(x.astype(jnp.bfloat16), ((0, Bp - B), (0, Hp - H)))
    elif Bp != B:
        xp = jnp.pad(x, ((0, Bp - B), (0, 0)))
    else:
        xp = x

    kernel = functools.partial(head_kernel, tanh_dtype=tanh_dtype)
    resident = dict(pipeline_mode=pl.Buffered(1))  # single-buffer constant-index operands

    out_padded = pl.pallas_call(
        kernel,
        out_shape=jax.ShapeDtypeStruct((Bp, Cp), jnp.float32),
        grid_spec=pltpu.PrefetchScalarGridSpec(
            num_scalar_prefetch=0,
            grid=(n_tiles,),
            in_specs=[
                pl.BlockSpec((tb, Hp), lambda i: (i, 0)),              # x: pipelined
                pl.BlockSpec((Hp, Hp), lambda i: (0, 0), **resident),  # W1: resident
                pl.BlockSpec((1, Hp), lambda i: (0, 0), **resident),   # b1: resident
                pl.BlockSpec((Hp, Cp), lambda i: (0, 0), **resident),  # W2: resident
                pl.BlockSpec((1, Cp), lambda i: (0, 0), **resident),   # b2: resident
            ],
            out_specs=pl.BlockSpec((tb, Cp), lambda i: (i, 0)),
        ),
        compiler_params=pltpu.CompilerParams(
            dimension_semantics=("parallel",),
            vmem_limit_bytes=vmem_limit,
        ),
    )(xp, w1p, b1p, w2p, b2p)

    return out_padded[:B, :C]


def reference(x, w1, b1, w2, b2):
    h = jnp.tanh(x @ w1 + b1[None, :])
    return h @ w2 + b2[None, :]


if __name__ == "__main__":
    # Small, module-consistent shapes: batch=8, hidden=32, num_class=8.
    B, H, C = 8, 32, 8

    key = jax.random.PRNGKey(0)
    kx, kw1, kb1, kw2, kb2 = jax.random.split(key, 5)

    x = jax.random.normal(kx, (B, H), dtype=jnp.float32)
    # Deterministic synthetic parameters (nn.Linear shapes, pre-transposed).
    w1 = jax.random.normal(kw1, (H, H), dtype=jnp.float32) * 0.05
    b1 = jax.random.normal(kb1, (H,), dtype=jnp.float32) * 0.05
    w2 = jax.random.normal(kw2, (H, C), dtype=jnp.float32) * 0.05
    b2 = jax.random.normal(kb2, (C,), dtype=jnp.float32) * 0.05

    # One-time weight pad + bf16 cast (model-load time, not per call).
    params = jax.block_until_ready(prepare_head_params(w1, b1, w2, b2))

    head = jax.jit(hubert_classification_head, static_argnums=(2,))
    out = jax.block_until_ready(head(x, params, C))

    ref = reference(x, w1, b1, w2, b2)
    assert out.shape == (B, C)
    # bf16 matmul operands (f32 accumulate) -> relaxed tolerance vs f32 reference.
    assert jnp.allclose(out, ref, atol=2e-2, rtol=2e-2), "mismatch vs reference"

    print("KERNEL_OK")
</pallas_src>

<mosaic_0001>
module attributes {stable_mosaic.version = 11 : i64} {
  func.func @head_kernel(%arg0: i32, %arg1: memref<8x128xbf16, #tpu.memory_space<vmem>>, %arg2: memref<128x128xbf16, #tpu.memory_space<vmem>>, %arg3: memref<1x128xf32, #tpu.memory_space<vmem>>, %arg4: memref<128x128xbf16, #tpu.memory_space<vmem>>, %arg5: memref<1x128xf32, #tpu.memory_space<vmem>>, %arg6: memref<8x128xf32, #tpu.memory_space<vmem>>) attributes {dimension_semantics = [#tpu.dimension_semantics<parallel>], iteration_bounds = array<i64: 1>, scalar_prefetch = 0 : i64, scratch_operands = 0 : i64, tpu.core_type = #tpu.core_type<tc>, window_params = [{transform_indices = @transform_0, window_bounds = array<i64: 8, 128>}, {pipeline_mode = #tpu.pipeline_mode<synchronous>, transform_indices = @transform_1, window_bounds = array<i64: 128, 128>}, {pipeline_mode = #tpu.pipeline_mode<synchronous>, transform_indices = @transform_2, window_bounds = array<i64: 1, 128>}, {pipeline_mode = #tpu.pipeline_mode<synchronous>, transform_indices = @transform_3, window_bounds = array<i64: 128, 128>}, {pipeline_mode = #tpu.pipeline_mode<synchronous>, transform_indices = @transform_4, window_bounds = array<i64: 1, 128>}, {transform_indices = @transform_5, window_bounds = array<i64: 8, 128>}]} {
    %c0 = arith.constant 0 : index
    %c0_0 = arith.constant 0 : index
    %0 = vector.load %arg1[%c0, %c0_0] : memref<8x128xbf16, #tpu.memory_space<vmem>>, vector<8x128xbf16>
    %c0_1 = arith.constant 0 : index
    %c0_2 = arith.constant 0 : index
    %1 = vector.load %arg2[%c0_1, %c0_2] : memref<128x128xbf16, #tpu.memory_space<vmem>>, vector<128x128xbf16>
    %cst = arith.constant dense<0.000000e+00> : vector<8x128xf32>
    %2 = tpu.matmul %0, %1, %cst {dimension_numbers = #tpu.dot_dimension_numbers<[1], [0], [0], [1], [0, 0, 1, 1], [], []>} : vector<8x128xbf16>, vector<128x128xbf16>, vector<8x128xf32> -> vector<8x128xf32>
    %c0_3 = arith.constant 0 : index
    %c0_4 = arith.constant 0 : index
    %3 = vector.load %arg3[%c0_3, %c0_4] : memref<1x128xf32, #tpu.memory_space<vmem>>, vector<1x128xf32>
    %4 = vector.broadcast %3 : vector<1x128xf32> to vector<8x128xf32>
    %5 = arith.addf %2, %4 : vector<8x128xf32>
    %6 = math.tanh %5 : vector<8x128xf32>
    %7 = arith.truncf %6 : vector<8x128xf32> to vector<8x128xbf16>
    %c0_5 = arith.constant 0 : index
    %c0_6 = arith.constant 0 : index
    %8 = vector.load %arg4[%c0_5, %c0_6] : memref<128x128xbf16, #tpu.memory_space<vmem>>, vector<128x128xbf16>
    %cst_7 = arith.constant dense<0.000000e+00> : vector<8x128xf32>
    %9 = tpu.matmul %7, %8, %cst_7 {dimension_numbers = #tpu.dot_dimension_numbers<[1], [0], [0], [1], [0, 0, 1, 1], [], []>} : vector<8x128xbf16>, vector<128x128xbf16>, vector<8x128xf32> -> vector<8x128xf32>
    %c0_8 = arith.constant 0 : index
    %c0_9 = arith.constant 0 : index
    %10 = vector.load %arg5[%c0_8, %c0_9] : memref<1x128xf32, #tpu.memory_space<vmem>>, vector<1x128xf32>
    %11 = vector.broadcast %10 : vector<1x128xf32> to vector<8x128xf32>
    %12 = arith.addf %9, %11 : vector<8x128xf32>
    %c0_10 = arith.constant 0 : index
    %c0_11 = arith.constant 0 : index
    %13 = vector.load %arg6[%c0_10, %c0_11] : memref<8x128xf32, #tpu.memory_space<vmem>>, vector<8x128xf32>
    tpu.vector_store %arg6[%c0_10, %c0_11], %12 {strides = array<i32>} : memref<8x128xf32, #tpu.memory_space<vmem>>, vector<8x128xf32>,
    return
  }
  func.func @transform_0(%arg0: i32) -> (i32, i32) {
    %c0_i32 = arith.constant 0 : i32
    %c0_i32_0 = arith.constant 0 : i32
    return %arg0, %c0_i32 : i32, i32
  }
  func.func @transform_1(%arg0: i32) -> (i32, i32) {
    %c0_i32 = arith.constant 0 : i32
    %c0_i32_0 = arith.constant 0 : i32
    %c0_i32_1 = arith.constant 0 : i32
    return %c0_i32, %c0_i32_0 : i32, i32
  }
  func.func @transform_2(%arg0: i32) -> (i32, i32) {
    %c0_i32 = arith.constant 0 : i32
    %c0_i32_0 = arith.constant 0 : i32
    %c0_i32_1 = arith.constant 0 : i32
    return %c0_i32, %c0_i32_0 : i32, i32
  }
  func.func @transform_3(%arg0: i32) -> (i32, i32) {
    %c0_i32 = arith.constant 0 : i32
    %c0_i32_0 = arith.constant 0 : i32
    %c0_i32_1 = arith.constant 0 : i32
    return %c0_i32, %c0_i32_0 : i32, i32
  }
  func.func @transform_4(%arg0: i32) -> (i32, i32) {
    %c0_i32 = arith.constant 0 : i32
    %c0_i32_0 = arith.constant 0 : i32
    %c0_i32_1 = arith.constant 0 : i32
    return %c0_i32, %c0_i32_0 : i32, i32
  }
  func.func @transform_5(%arg0: i32) -> (i32, i32) {
    %c0_i32 = arith.constant 0 : i32
    %c0_i32_0 = arith.constant 0 : i32
    return %arg0, %c0_i32 : i32, i32
  }
}

</mosaic_0001>

<llo_original>
// kernel: hubert_classification_head.1
$region0: #{hubert_classification_head.1}
  #allocation0 [shape = 'u32[]', space=smem, size = 0x4, offset = 0x4, fixed_abs, tag = 'smem constant byte address 0x4 - core index']
  #allocation1 [shape = 'u32[72,128]{1,0:T(1,128)}', space=vmem, size = 0x9000, scoped, tag = 'internal scratch']
  %s0 = inlined_call_operand.vmem [shape: bf16[8,128], index: 0, kind: input, shape index: {}]
  %s1 = inlined_call_operand.hbm [shape: bf16[128,128], index: 1, kind: input, shape index: {}]
  %s2 = inlined_call_operand.vmem [shape: f32[1,128], index: 2, kind: input, shape index: {}]
  %s3 = inlined_call_operand.hbm [shape: bf16[128,128], index: 3, kind: input, shape index: {}]
  %s4 = inlined_call_operand.vmem [shape: f32[1,128], index: 4, kind: input, shape index: {}]
  %s5 = inlined_call_operand.hbm [shape: f32[8,128], index: 5, kind: output, shape index: {}]
  %s6 = sld [smem:[#allocation0]]
  $region38: #{hubert_classification_head.1} parent=0
    _
  %s8 = ssub.s32 1, %s6
  %s9 = scalar_select 0, %s8, %s6
  $region1: #{hubert_classification_head.1} parent=0
    #allocation2 [shape = 'u8[32768]{0}', space=vmem, size = 0x8000, scoped, tag = 'input window, operand 1, single buffered']
    #allocation3 [shape = 's32[1]{0}', space=sflag, size = 0x4, scoped, tag = 'scoped memory for hubert_classification_head.1']
    #allocation4 [shape = 's32[1]{0}', space=sflag, size = 0x4, scoped, tag = 'scoped memory for hubert_classification_head.1']
    #allocation5 [shape = 'u8[32768]{0}', space=vmem, size = 0x8000, scoped, tag = 'input window, operand 3, single buffered']
    #allocation6 [shape = 's32[1]{0}', space=sflag, size = 0x4, scoped, tag = 'scoped memory for hubert_classification_head.1']
    #allocation7 [shape = 'u8[4096]{0}', space=vmem, size = 0x1000, scoped, tag = 'output window, operand 0, single buffered']
    %10 = vsyncpa [#allocation3], 0
    %11 = vsyncpa [#allocation6], 0
    %12 = vsyncpa [#allocation4], 0
    // Predicated region
    $region2: #{hubert_classification_head.1} parent=1 // pred_check
      _
    $region3: #{hubert_classification_head.1} parent=1 // pred_check_branch
      %14 = sbr.rel (0) target = $region5
    $region4: #{hubert_classification_head.1} parent=1 // pred_region
      _
    $region5: #{hubert_classification_head.1} parent=1 // pred_fallthru
      _
    // Predicated region
    $region6: #{hubert_classification_head.1} parent=1 // pred_check
      _
    $region7: #{hubert_classification_head.1} parent=1 // pred_check_branch
      %16 = sbr.rel (0) target = $region9
    $region8: #{hubert_classification_head.1} parent=1 // pred_region
      %18 = vsyncadd [#allocation3], 0
      %s19 = sshll.u32 %s1, 4
      %s20 = int_to_ptr.hbm [resolvable:$true] %s19
      %s21 = sshll.u32 [#allocation2], 4
      %s22 = int_to_ptr.vmem [resolvable:$true] %s21
      %27 = dma.hbm_to_vmem [thread:$0]  %s20, 1024, %s22, [#allocation3], 64, 64, 4
    $region9: #{hubert_classification_head.1} parent=1 // pred_fallthru
      _
    // Predicated region
    $region10: #{hubert_classification_head.1} parent=1 // pred_check
      _
    $region11: #{hubert_classification_head.1} parent=1 // pred_check_branch
      %29 = sbr.rel (0) target = $region13
    $region12: #{hubert_classification_head.1} parent=1 // pred_region
      _
    $region13: #{hubert_classification_head.1} parent=1 // pred_fallthru
      _
    // Predicated region
    $region14: #{hubert_classification_head.1} parent=1 // pred_check
      _
    $region15: #{hubert_classification_head.1} parent=1 // pred_check_branch
      %31 = sbr.rel (0) target = $region17
    $region16: #{hubert_classification_head.1} parent=1 // pred_region
      %33 = vsyncadd [#allocation6], 0
      %s34 = sshll.u32 %s3, 4
      %s35 = int_to_ptr.hbm [resolvable:$true] %s34
      %s36 = sshll.u32 [#allocation5], 4
      %s37 = int_to_ptr.vmem [resolvable:$true] %s36
      %42 = dma.hbm_to_vmem [thread:$0]  %s35, 1024, %s37, [#allocation6], 64, 64, 4
    $region17: #{hubert_classification_head.1} parent=1 // pred_fallthru
      _
    // Predicated region
    $region18: #{hubert_classification_head.1} parent=1 // pred_check
      _
    $region19: #{hubert_classification_head.1} parent=1 // pred_check_branch
      %44 = sbr.rel (0) target = $region21
    $region20: #{hubert_classification_head.1} parent=1 // pred_region
      _
    $region21: #{hubert_classification_head.1} parent=1 // pred_fallthru
      _
    // Predicated region
    $region22: #{hubert_classification_head.1} parent=1 // pred_check
      _
    $region23: #{hubert_classification_head.1} parent=1 // pred_check_branch
      %46 = sbr.rel (0) target = $region25
    $region24: #{hubert_classification_head.1} parent=1 // pred_region
      %48 = dma.done [#allocation3], 1024
    $region25: #{hubert_classification_head.1} parent=1 // pred_fallthru
      _
    // Predicated region
    $region26: #{hubert_classification_head.1} parent=1 // pred_check
      _
    $region27: #{hubert_classification_head.1} parent=1 // pred_check_branch
      %50 = sbr.rel (0) target = $region29
    $region28: #{hubert_classification_head.1} parent=1 // pred_region
      %52 = dma.done [#allocation6], 1024
    $region29: #{hubert_classification_head.1} parent=1 // pred_fallthru
      _
    %v53 = vld [vmem:[%s0] sm:$0xf]
    %v54 = vld [vmem:[#allocation2] sm:$0xf]
    %v55 = vld [vmem:[#allocation2 + $0x4] sm:$0xf]
    %v56 = vld [vmem:[#allocation2 + $0x8] sm:$0xf]
    %v57 = vld [vmem:[#allocation2 + $0xc] sm:$0xf]
    %v58 = vld [vmem:[#allocation2 + $0x10] sm:$0xf]
    %v59 = vld [vmem:[#allocation2 + $0x14] sm:$0xf]
    %v60 = vld [vmem:[#allocation2 + $0x18] sm:$0xf]
    %v61 = vld [vmem:[#allocation2 + $0x1c] sm:$0xf]
    %v62 = vld [vmem:[#allocation2 + $0x20] sm:$0xf]
    %v63 = vld [vmem:[#allocation2 + $0x24] sm:$0xf]
    %v64 = vld [vmem:[#allocation2 + $0x28] sm:$0xf]
    %v65 = vld [vmem:[#allocation2 + $0x2c] sm:$0xf]
    %v66 = vld [vmem:[#allocation2 + $0x30] sm:$0xf]
    %v67 = vld [vmem:[#allocation2 + $0x34] sm:$0xf]
    %v68 = vld [vmem:[#allocation2 + $0x38] sm:$0xf]
    %v69 = vld [vmem:[#allocation2 + $0x3c] sm:$0xf]
    %v70 = vld [vmem:[%s2] sm:$0x1]
    %v72 = vperm.slane %v70, 0
    %v90 = vunpack.c.l.b16 %v54
    %v91 = vunpack.c.l.b16 %v55
    %v92 = vunpack.c.l.b16 %v56
    %v93 = vunpack.c.l.b16 %v57
    %v94 = vunpack.c.l.b16 %v58
    %v95 = vunpack.c.l.b16 %v59
    %v96 = vunpack.c.l.b16 %v60
    %v97 = vunpack.c.l.b16 %v61
    %v98 = vunpack.c.l.b16 %v62
    %v99 = vunpack.c.l.b16 %v63
    %v100 = vunpack.c.l.b16 %v64
    %v101 = vunpack.c.l.b16 %v65
    %v102 = vunpack.c.l.b16 %v66
    %v103 = vunpack.c.l.b16 %v67
    %v104 = vunpack.c.l.b16 %v68
    %v105 = vunpack.c.l.b16 %v69
    %v106 = vpack.c.b16 %v91, %v90
    %v107 = vpack.c.b16 %v93, %v92
    %v108 = vpack.c.b16 %v95, %v94
    %v109 = vpack.c.b16 %v97, %v96
    %v110 = vpack.c.b16 %v99, %v98
    %v111 = vpack.c.b16 %v101, %v100
    %v112 = vpack.c.b16 %v103, %v102
    %v113 = vpack.c.b16 %v105, %v104
    %122 = vmatpush.bf16.msra.mxu0 %v113
    %123 = vmatpush.bf16.msra.mxu0 %v112
    %124 = vmatpush.bf16.msra.mxu0 %v111
    %125 = vmatpush.bf16.msra.mxu0 %v110
    %126 = vmatpush.bf16.msra.mxu0 %v109
    %127 = vmatpush.bf16.msra.mxu0 %v108
    %128 = vmatpush.bf16.msra.mxu0 %v107
    %129 = vmatpush.bf16.msra.mxu0 %v106
    %130 = vmatmul.bf16.gmra.mxu0 %v53
    %v131 = vpop.f32.mrf.mxu0
    %v132 = vadd.f32 %v72, %v131
    %v133 = vpop.f32.mrf.mxu0
    %134 = vdwg.mxu0
    %v135 = vtanh.pop %v132
    %v136 = vpack.c.bf16 %v135, %v135
    %v137 = vld [vmem:[#allocation5] sm:$0xf]
    %v138 = vld [vmem:[#allocation5 + $0x4] sm:$0xf]
    %v139 = vld [vmem:[#allocation5 + $0x8] sm:$0xf]
    %v140 = vld [vmem:[#allocation5 + $0xc] sm:$0xf]
    %v141 = vld [vmem:[#allocation5 + $0x10] sm:$0xf]
    %v142 = vld [vmem:[#allocation5 + $0x14] sm:$0xf]
    %v143 = vld [vmem:[#allocation5 + $0x18] sm:$0xf]
    %v144 = vld [vmem:[#allocation5 + $0x1c] sm:$0xf]
    %v145 = vld [vmem:[#allocation5 + $0x20] sm:$0xf]
    %v146 = vld [vmem:[#allocation5 + $0x24] sm:$0xf]
    %v147 = vld [vmem:[#allocation5 + $0x28] sm:$0xf]
    %v148 = vld [vmem:[#allocation5 + $0x2c] sm:$0xf]
    %v149 = vld [vmem:[#allocation5 + $0x30] sm:$0xf]
    %v150 = vld [vmem:[#allocation5 + $0x34] sm:$0xf]
    %v151 = vld [vmem:[#allocation5 + $0x38] sm:$0xf]
    %v152 = vld [vmem:[#allocation5 + $0x3c] sm:$0xf]
    %v153 = vld [vmem:[%s4] sm:$0x1]
    %v155 = vperm.slane %v153, 0
    %v173 = vunpack.c.l.b16 %v137
    %v174 = vunpack.c.l.b16 %v138
    %v175 = vunpack.c.l.b16 %v139
    %v176 = vunpack.c.l.b16 %v140
    %v177 = vunpack.c.l.b16 %v141
    %v178 = vunpack.c.l.b16 %v142
    %v179 = vunpack.c.l.b16 %v143
    %v180 = vunpack.c.l.b16 %v144
    %v181 = vunpack.c.l.b16 %v145
    %v182 = vunpack.c.l.b16 %v146
    %v183 = vunpack.c.l.b16 %v147
    %v184 = vunpack.c.l.b16 %v148
    %v185 = vunpack.c.l.b16 %v149
    %v186 = vunpack.c.l.b16 %v150
    %v187 = vunpack.c.l.b16 %v151
    %v188 = vunpack.c.l.b16 %v152
    %v189 = vpack.c.b16 %v174, %v173
    %v190 = vpack.c.b16 %v176, %v175
    %v191 = vpack.c.b16 %v178, %v177
    %v192 = vpack.c.b16 %v180, %v179
    %v193 = vpack.c.b16 %v182, %v181
    %v194 = vpack.c.b16 %v184, %v183
    %v195 = vpack.c.b16 %v186, %v185
    %v196 = vpack.c.b16 %v188, %v187
    %205 = vmatpush.bf16.msra.mxu0 %v196
    %206 = vmatpush.bf16.msra.mxu0 %v195
    %207 = vmatpush.bf16.msra.mxu0 %v194
    %208 = vmatpush.bf16.msra.mxu0 %v193
    %209 = vmatpush.bf16.msra.mxu0 %v192
    %210 = vmatpush.bf16.msra.mxu0 %v191
    %211 = vmatpush.bf16.msra.mxu0 %v190
    %212 = vmatpush.bf16.msra.mxu0 %v189
    %213 = vmatmul.bf16.gmra.mxu0 %v136
    %v214 = vpop.f32.mrf.mxu0
    %v215 = vadd.f32 %v155, %v214
    %v216 = vpop.f32.mrf.mxu0
    %217 = vdwg.mxu0
    %218 = vst [vmem:[#allocation7] sm:$0xff] %v215
    // Predicated region
    $region30: #{hubert_classification_head.1} parent=1 // pred_check
      _
    $region31: #{hubert_classification_head.1} parent=1 // pred_check_branch
      %220 = sbr.rel (0) target = $region33
    $region32: #{hubert_classification_head.1} parent=1 // pred_region
      %222 = vsyncadd [#allocation4], 0
      %s224 = sshll.u32 [#allocation7], 4
      %s225 = int_to_ptr.vmem [resolvable:$true] %s224
      %s226 = sshll.u32 %s5, 4
      %s227 = int_to_ptr.hbm [resolvable:$true] %s226
      %229 = dma.vmem_to_hbm [thread:$0]  %s225, 128, %s227, [#allocation4]
    $region33: #{hubert_classification_head.1} parent=1 // pred_fallthru
      _
    // Predicated region
    $region34: #{hubert_classification_head.1} parent=1 // pred_check
      _
    $region35: #{hubert_classification_head.1} parent=1 // pred_check_branch
      %231 = sbr.rel (0) target = $region37
    $region36: #{hubert_classification_head.1} parent=1 // pred_region
      %233 = dma.done [#allocation4], 128
    $region37: #{hubert_classification_head.1} parent=1 // pred_fallthru
      _
    %234 = vsyncpa [#allocation3], 1
    %235 = vsyncpa [#allocation6], 1
    %236 = vsyncpa [#allocation4], 1

</llo_original>
